<compile_context>
chip_gen: v5e
topology: v5e:2x2
jax: 0.10.0
libtpu: 0.0.40
codegen_flags: <defaults>
</compile_context>

<pallas_src>
import math

import jax
import jax.numpy as jnp
from jax import lax
from jax.experimental import pallas as pl
from jax.experimental.pallas import tpu as pltpu

EPS = 1e-07
# logit(1 - EPS) == -logit(EPS) == log((1 - EPS) / EPS)
_LOGIT_MAX = math.log((1.0 - EPS) / EPS)


def _round_up(v, m):
    return ((v + m - 1) // m) * m


# --------------------------------------------------------------------------
# (A) Fused dense + sigmoid + LogitWrapper  ==  clip(x @ w + b, +-LMAX)
# --------------------------------------------------------------------------
def _logit_wrapper_kernel(x_ref, w_ref, b_ref, o_ref):
    """One (batch-tile i, feature-tile k) grid step.

    x_ref: (TB, TK) f32 input block.
    w_ref: (1, TK)  f32 weight-row chunk.
    b_ref: (1, 1)   f32 bias scalar in SMEM.
    o_ref: (1, TB)  f32 lane-dense logits block, resident across the k axis.
    """
    k = pl.program_id(1)

    @pl.when(k == 0)
    def _init():
        o_ref[...] = jnp.zeros_like(o_ref)

    # z[0, b] += sum_k w[0, k] * x[b, k]  (NT contraction -> result already has
    # the batch dimension on lanes, i.e. the lane-dense output layout).
    o_ref[...] += lax.dot_general(
        w_ref[...], x_ref[...],
        dimension_numbers=(((1,), (1,)), ((), ())),
        preferred_element_type=jnp.float32,
    )

    @pl.when(k == pl.num_programs(1) - 1)
    def _finalize():
        z = o_ref[...] + b_ref[0, 0]
        # logit(clamp(sigmoid(z), eps, 1 - eps)) == clip(z, -LMAX, +LMAX)
        o_ref[...] = jnp.clip(z, -_LOGIT_MAX, _LOGIT_MAX)


def logit_wrapper_forward(x, w, b, *, block_b=1024, block_h=512):
    """x: [B, H] f32, w: [H, 1] f32, b: scalar-ish f32 -> [B, 1] logits."""
    B, H = x.shape
    x = x.astype(jnp.float32)
    w_row = jnp.asarray(w, jnp.float32).reshape(1, H)   # free row-major reinterpretation
    b2 = jnp.asarray(b, jnp.float32).reshape(1, 1)

    # Tile sizes: tb doubles as the x-block sublane dim and the output lane dim,
    # th is the x-block lane dim -> both must be multiples of 128.  Pad ragged
    # operands with zeros (zero feature columns contribute nothing; padded batch
    # rows are sliced off the output).
    block_b = _round_up(max(int(block_b), 128), 128)
    block_h = _round_up(max(int(block_h), 128), 128)
    tb = min(block_b, _round_up(B, 128))
    th = min(block_h, _round_up(H, 128))
    Bp = _round_up(B, tb)
    Hp = _round_up(H, th)
    if Bp != B or Hp != H:
        x = jnp.pad(x, ((0, Bp - B), (0, Hp - H)))
    if Hp != H:
        w_row = jnp.pad(w_row, ((0, 0), (0, Hp - H)))
    gb, gk = Bp // tb, Hp // th

    out = pl.pallas_call(
        _logit_wrapper_kernel,
        out_shape=jax.ShapeDtypeStruct((1, Bp), jnp.float32),
        grid=(gb, gk),
        in_specs=[
            pl.BlockSpec((tb, th), lambda i, k: (i, k)),        # x tile
            pl.BlockSpec((1, th), lambda i, k: (0, k)),         # weight-row chunk
            pl.BlockSpec(memory_space=pltpu.MemorySpace.SMEM),  # scalar bias
        ],
        out_specs=pl.BlockSpec((1, tb), lambda i, k: (0, i)),   # lane-dense logits
        compiler_params=pltpu.CompilerParams(
            dimension_semantics=("parallel", "arbitrary"),      # batch axis -> megacore
        ),
    )(x, w_row, b2)

    return out[:, :B].reshape(B, 1)


# --------------------------------------------------------------------------
# (B) Literal LogitWrapper over an arbitrary probability tensor
# --------------------------------------------------------------------------
def _logit_of_prob_kernel(p_ref, o_ref):
    p = jnp.clip(p_ref[...], EPS, 1.0 - EPS)
    o_ref[...] = jnp.log(p / (1.0 - p))


def logit_of_probabilities(p, *, lanes=1024):
    """Elementwise clamp -> log-odds for any probability tensor (any shape)."""
    orig_shape = p.shape
    orig_dtype = p.dtype
    flat = jnp.ravel(p).astype(jnp.float32)
    n = flat.shape[0]

    # Lay out as a lane-dense (rows, lanes) slab with rows a multiple of 8 so
    # loads/stores are full unmasked vregs.  Pad with 0.5 (logit 0) and slice off.
    unit = 8 * lanes
    n_pad = _round_up(max(n, 1), unit)
    if n_pad != n:
        flat = jnp.pad(flat, (0, n_pad - n), constant_values=0.5)
    rows = n_pad // lanes
    block_rows = 8
    for cand in (512, 256, 128, 64, 32, 16, 8):
        if rows % cand == 0:
            block_rows = cand
            break
    p2 = flat.reshape(rows, lanes)

    out = pl.pallas_call(
        _logit_of_prob_kernel,
        out_shape=jax.ShapeDtypeStruct((rows, lanes), jnp.float32),
        grid=(rows // block_rows,),
        in_specs=[pl.BlockSpec((block_rows, lanes), lambda i: (i, 0))],
        out_specs=pl.BlockSpec((block_rows, lanes), lambda i: (i, 0)),
        compiler_params=pltpu.CompilerParams(dimension_semantics=("parallel",)),
    )(p2)

    return out.reshape(n_pad)[:n].reshape(orig_shape).astype(orig_dtype)


# --------------------------------------------------------------------------
# References & self-test
# --------------------------------------------------------------------------
def _reference_model_plus_wrapper(x, w, b):
    # Literal (f32 round-trip) formulation of the PyTorch pipeline.
    z = x @ w + b
    p = jax.nn.sigmoid(z)
    p = jnp.clip(p, EPS, 1.0 - EPS)
    return jnp.log(p / (1.0 - p))


if __name__ == "__main__":
    key = jax.random.PRNGKey(0)
    kx, kw, kb = jax.random.split(key, 3)

    # ---- (A) fused path: wrapped model = dense + sigmoid -------------------
    B, H = 256, 256   # small, but with 128x128 blocks it exercises a 2x2 grid
    x = jax.random.normal(kx, (B, H), dtype=jnp.float32)
    w = jax.random.normal(kw, (H, 1), dtype=jnp.float32) * 0.1
    b = jax.random.normal(kb, (1, 1), dtype=jnp.float32) * 0.1

    out = jax.block_until_ready(logit_wrapper_forward(x, w, b, block_b=128, block_h=128))
    assert out.shape == (B, 1)

    exact = jnp.clip(x @ w + b, -_LOGIT_MAX, _LOGIT_MAX)
    assert jnp.allclose(out, exact, atol=1e-4, rtol=1e-4)

    ref = _reference_model_plus_wrapper(x, w, b)
    assert jnp.allclose(out, ref, atol=1e-3, rtol=1e-3)

    # Ragged shapes exercise the zero-padding path.
    B2, H2 = 200, 300
    x2 = jax.random.normal(kx, (B2, H2), dtype=jnp.float32)
    w2 = jax.random.normal(kw, (H2, 1), dtype=jnp.float32) * 0.1
    b2 = jax.random.normal(kb, (1, 1), dtype=jnp.float32) * 0.1
    out2 = jax.block_until_ready(logit_wrapper_forward(x2, w2, b2, block_b=128, block_h=128))
    exact2 = jnp.clip(x2 @ w2 + b2, -_LOGIT_MAX, _LOGIT_MAX)
    assert out2.shape == (B2, 1)
    assert jnp.allclose(out2, exact2, atol=1e-4, rtol=1e-4)

    # ---- (B) generic path: literal LogitWrapper over probabilities ---------
    p = jax.nn.sigmoid(x @ w + b)                       # (B, 1) probabilities
    logits = jax.block_until_ready(logit_of_probabilities(p))
    p_clamped = jnp.clip(p, EPS, 1.0 - EPS)
    ref_lit = jnp.log(p_clamped / (1.0 - p_clamped))
    assert logits.shape == p.shape
    assert jnp.allclose(logits, ref_lit, atol=1e-3, rtol=1e-3)

    print("KERNEL_OK")
</pallas_src>

<mosaic_0001>
module attributes {stable_mosaic.version = 11 : i64} {
  func.func @_logit_wrapper_kernel(%arg0: i32, %arg1: i32, %arg2: memref<128x128xf32, #tpu.memory_space<vmem>>, %arg3: memref<1x128xf32, #tpu.memory_space<vmem>>, %arg4: memref<1x1xf32, #tpu.memory_space<smem>>, %arg5: memref<1x128xf32, #tpu.memory_space<vmem>>) attributes {dimension_semantics = [#tpu.dimension_semantics<parallel>, #tpu.dimension_semantics<arbitrary>], iteration_bounds = array<i64: 2, 2>, scalar_prefetch = 0 : i64, scratch_operands = 0 : i64, tpu.core_type = #tpu.core_type<tc>, window_params = [{transform_indices = @transform_0, window_bounds = array<i64: 128, 128>}, {transform_indices = @transform_1, window_bounds = array<i64: 1, 128>}, {transform_indices = @transform_2, window_bounds = array<i64: 1, 1>}, {transform_indices = @transform_3, window_bounds = array<i64: 1, 128>}]} {
    %c0_i32 = arith.constant 0 : i32
    %0 = arith.cmpi eq, %arg1, %c0_i32 : i32
    %1 = arith.extui %0 : i1 to i32
    %c0_i32_0 = arith.constant 0 : i32
    %2 = arith.cmpi ne, %1, %c0_i32_0 : i32
    scf.if %2 {
      %cst_9 = arith.constant 0.000000e+00 : f32
      %12 = vector.broadcast %cst_9 : f32 to vector<1x128xf32>
      %c0_10 = arith.constant 0 : index
      %c0_11 = arith.constant 0 : index
      %13 = vector.load %arg5[%c0_10, %c0_11] : memref<1x128xf32, #tpu.memory_space<vmem>>, vector<1x128xf32>
      tpu.vector_store %arg5[%c0_10, %c0_11], %12 {strides = array<i32>} : memref<1x128xf32, #tpu.memory_space<vmem>>, vector<1x128xf32>,
    } else {
    }
    %c0 = arith.constant 0 : index
    %c0_1 = arith.constant 0 : index
    %3 = vector.load %arg5[%c0, %c0_1] : memref<1x128xf32, #tpu.memory_space<vmem>>, vector<1x128xf32>
    %c0_2 = arith.constant 0 : index
    %c0_3 = arith.constant 0 : index
    %4 = vector.load %arg3[%c0_2, %c0_3] : memref<1x128xf32, #tpu.memory_space<vmem>>, vector<1x128xf32>
    %c0_4 = arith.constant 0 : index
    %c0_5 = arith.constant 0 : index
    %5 = vector.load %arg2[%c0_4, %c0_5] : memref<128x128xf32, #tpu.memory_space<vmem>>, vector<128x128xf32>
    %cst = arith.constant dense<0.000000e+00> : vector<1x128xf32>
    %6 = tpu.matmul %4, %5, %cst {dimension_numbers = #tpu.dot_dimension_numbers<[1], [1], [0], [0], [0, 0, 1, 0], [], []>} : vector<1x128xf32>, vector<128x128xf32>, vector<1x128xf32> -> vector<1x128xf32>
    %7 = arith.addf %3, %6 : vector<1x128xf32>
    %c0_6 = arith.constant 0 : index
    %c0_7 = arith.constant 0 : index
    %8 = vector.load %arg5[%c0_6, %c0_7] : memref<1x128xf32, #tpu.memory_space<vmem>>, vector<1x128xf32>
    tpu.vector_store %arg5[%c0_6, %c0_7], %7 {strides = array<i32>} : memref<1x128xf32, #tpu.memory_space<vmem>>, vector<1x128xf32>,
    %c1_i32 = arith.constant 1 : i32
    %9 = arith.cmpi eq, %arg1, %c1_i32 : i32
    %10 = arith.extui %9 : i1 to i32
    %c0_i32_8 = arith.constant 0 : i32
    %11 = arith.cmpi ne, %10, %c0_i32_8 : i32
    scf.if %11 {
      %c0_9 = arith.constant 0 : index
      %c0_10 = arith.constant 0 : index
      %12 = vector.load %arg5[%c0_9, %c0_10] : memref<1x128xf32, #tpu.memory_space<vmem>>, vector<1x128xf32>
      %c0_11 = arith.constant 0 : index
      %c0_12 = arith.constant 0 : index
      %13 = memref.load %arg4[%c0_11, %c0_12] : memref<1x1xf32, #tpu.memory_space<smem>>
      %14 = vector.broadcast %13 : f32 to vector<1x128xf32>
      %15 = arith.addf %12, %14 : vector<1x128xf32>
      %cst_13 = arith.constant -16.1180954 : f32
      %cst_14 = arith.constant 16.1180954 : f32
      %16 = vector.broadcast %cst_13 : f32 to vector<1x128xf32>
      %17 = arith.maximumf %16, %15 : vector<1x128xf32>
      %18 = vector.broadcast %cst_14 : f32 to vector<1x128xf32>
      %19 = arith.minimumf %18, %17 : vector<1x128xf32>
      %c0_15 = arith.constant 0 : index
      %c0_16 = arith.constant 0 : index
      %20 = vector.load %arg5[%c0_15, %c0_16] : memref<1x128xf32, #tpu.memory_space<vmem>>, vector<1x128xf32>
      tpu.vector_store %arg5[%c0_15, %c0_16], %19 {strides = array<i32>} : memref<1x128xf32, #tpu.memory_space<vmem>>, vector<1x128xf32>,
    } else {
    }
    return
  }
  func.func @transform_0(%arg0: i32, %arg1: i32) -> (i32, i32) {
    %c0_i32 = arith.constant 0 : i32
    return %arg0, %arg1 : i32, i32
  }
  func.func @transform_1(%arg0: i32, %arg1: i32) -> (i32, i32) {
    %c0_i32 = arith.constant 0 : i32
    %c0_i32_0 = arith.constant 0 : i32
    return %c0_i32, %arg1 : i32, i32
  }
  func.func @transform_2(%arg0: i32, %arg1: i32) -> (i32, i32) {
    %c0_i32 = arith.constant 0 : i32
    %c0_i32_0 = arith.constant 0 : i32
    %c0_i32_1 = arith.constant 0 : i32
    return %c0_i32, %c0_i32_0 : i32, i32
  }
  func.func @transform_3(%arg0: i32, %arg1: i32) -> (i32, i32) {
    %c0_i32 = arith.constant 0 : i32
    %c0_i32_0 = arith.constant 0 : i32
    return %c0_i32, %arg0 : i32, i32
  }
}

</mosaic_0001>

<llo_original>
// kernel: tpu_custom_call.1
$region0: #{tpu_custom_call.1}
  #allocation0 [shape = 'u32[]', space=smem, size = 0x4, offset = 0x4, fixed_abs, tag = 'smem constant byte address 0x4 - core index']
  #allocation1 [shape = 'u32[72,128]{1,0:T(1,128)}', space=vmem, size = 0x9000, scoped, tag = 'internal scratch']
  #allocation2 [shape = 'f32[1,1]{1,0:T(1,128)S(6)}', space=smem, size = 0x200, scoped, tag = 'scoped memory for tpu_custom_call.1']
  %s0 = inlined_call_operand.hbm [shape: f32[256,256], index: 0, kind: input, shape index: {}]
  %s1 = inlined_call_operand.vmem [shape: f32[1,256], index: 1, kind: input, shape index: {}]
  %s2 = inlined_call_operand.<no memory space> [shape: f32[1,1], index: 2, kind: input, shape index: {}]
  %s3 = inlined_call_operand.hbm [shape: f32[1,256], index: 3, kind: output, shape index: {}]
  %s4 = sld [smem:[#allocation0]]
  $region57: #{tpu_custom_call.1} parent=0
    _
  %s6 = ssub.s32 1, %s4
  %s7 = scalar_select 0, %s6, %s4
  %8 = sst [smem:[#allocation2]] %s2
  $region1: #{tpu_custom_call.1} parent=0
    #allocation3 [shape = 'u8[131072]{0}', space=vmem, size = 0x20000, scoped, tag = 'input window, operand 0']
    #allocation4 [shape = 's32[2]{0}', space=sflag, size = 0x8, scoped, tag = 'scoped memory for tpu_custom_call.1']
    #allocation5 [shape = 's32[2]{0}', space=sflag, size = 0x8, scoped, tag = 'scoped memory for tpu_custom_call.1']
    #allocation6 [shape = 'u8[1024]{0}', space=vmem, size = 0x400, scoped, tag = 'output window, operand 0']
    %9 = vsyncpa [#allocation4], 0
    %s10 = scalar_lea.sflag [#allocation4], 1
    %11 = vsyncpa %s10, 0
    %12 = vsyncpa [#allocation5], 0
    %s13 = scalar_lea.sflag [#allocation5], 1
    %14 = vsyncpa %s13, 0
    loop: start=0, step=1, limit=6
    $region2: #{tpu_custom_call.1} parent=1 // loop_pre_header
      _
    $region3: #{tpu_custom_call.1} parent=1 // loop_header
      %s16 = sphi 0, %s20
      %p17 = scmp.ge.s32.totalorder %s16, 6
      %s23 = sphi 0, %s35
      %s24 = sphi 0, %s31
      %s25 = sphi 0, %s23
      %s26 = sphi 0, %s24
      %s27 = sphi 0, %s25
      %s28 = sphi 0, %s26
      %s40 = sphi 0, %s42
      %s43 = sphi 0, %s40
      %s44 = sphi 0, %s43
      %s60 = sphi 0, %s44
      %s66 = sphi 0, %s68
      %s69 = sphi 0, %s66
      %s70 = sphi 0, %s69
      %s86 = sphi 0, %s70
      %s90 = sphi 0, %s90
      %s92 = sphi 0, %s90
      %s93 = sphi 0, %s92
      %s107 = sphi 0, %s93
      %s113 = sphi 0, %s115
      %s116 = sphi 0, %s113
      %s117 = sphi 0, %s116
      %s133 = sphi 0, %s117
    $region4: #{tpu_custom_call.1} parent=1 // loop_header_branch
      %19 = sbr.rel (%p17) target = $region8
    $region5: #{tpu_custom_call.1} parent=1 // loop_body
      %s21 = ssub.s32 %s16, 1
      %s22 = ssub.s32 %s16, 2
      %s29 = sadd.s32 1, %s24
      %p30 = scmp.ge.s32.totalorder %s29, 2
      %s31 = scalar_select %p30, 0, %s29
      %s32 = sadd.s32 1, %s23
      %s33 = scalar_select %p30, %s32, %s23
      %p34 = scmp.ge.s32.totalorder %s33, 2
      %s35 = scalar_select %p34, 0, %s33
      %s36 = ssub.s32 %s23, %s35
      %s37 = ssub.s32 %s24, %s31
      %s38 = sor.u32 %s36, %s37
      %p39 = scmp.eq.s32.totalorder %s38, 0
      %s41 = sadd.s32 %s40, 1
      %s42 = scalar_select %p39, %s40, %s41
      %p45 = pneg %p39
      %p46 = scmp.eq.s32.totalorder %s16, 3
      %p47 = por %p45, %p46
      %p48 = scmp.ne.s32.totalorder %s40, %s43
      %p49 = scmp.eq.s32.totalorder %s16, 0
      %p50 = por %p48, %p49
      %p51 = scmp.ne.s32.totalorder %s40, %s43
      %p52 = scmp.eq.s32.totalorder %s21, 3
      %p53 = por %p51, %p52
      %p54 = scmp.ne.s32.totalorder %s43, %s44
      %p55 = scmp.eq.s32.totalorder %s21, 0
      %p56 = por %p54, %p55
      %p57 = scmp.ne.s32.totalorder %s43, %s44
      %p58 = scmp.eq.s32.totalorder %s22, 3
      %p59 = por %p57, %p58
      %p61 = scmp.ne.s32.totalorder %s44, %s60
      %p62 = scmp.eq.s32.totalorder %s22, 0
      %p63 = por %p61, %p62
      %s64 = ssub.s32 %s24, %s31
      %p65 = scmp.eq.s32.totalorder %s64, 0
      %s67 = sadd.s32 %s66, 1
      %s68 = scalar_select %p65, %s66, %s67
      %p71 = pneg %p65
      %p72 = scmp.eq.s32.totalorder %s16, 3
      %p73 = por %p71, %p72
      %p74 = scmp.ne.s32.totalorder %s66, %s69
      %p75 = scmp.eq.s32.totalorder %s16, 0
      %p76 = por %p74, %p75
      %p77 = scmp.ne.s32.totalorder %s66, %s69
      %p78 = scmp.eq.s32.totalorder %s21, 3
      %p79 = por %p77, %p78
      %p80 = scmp.ne.s32.totalorder %s69, %s70
      %p81 = scmp.eq.s32.totalorder %s21, 0
      %p82 = por %p80, %p81
      %p83 = scmp.ne.s32.totalorder %s69, %s70
      %p84 = scmp.eq.s32.totalorder %s22, 3
      %p85 = por %p83, %p84
      %p87 = scmp.ne.s32.totalorder %s70, %s86
      %p88 = scmp.eq.s32.totalorder %s22, 0
      %p89 = por %p87, %p88
      %s91 = sadd.s32 %s90, 1
      %p94 = scmp.eq.s32.totalorder %s16, 3
      %p95 = scmp.ne.s32.totalorder %s90, %s92
      %p96 = scmp.eq.s32.totalorder %s16, 0
      %p97 = por %p95, %p96
      %p98 = scmp.ne.s32.totalorder %s90, %s92
      %p99 = scmp.eq.s32.totalorder %s21, 3
      %p100 = por %p98, %p99
      %p101 = scmp.ne.s32.totalorder %s92, %s93
      %p102 = scmp.eq.s32.totalorder %s21, 0
      %p103 = por %p101, %p102
      %p104 = scmp.ne.s32.totalorder %s92, %s93
      %p105 = scmp.eq.s32.totalorder %s22, 3
      %p106 = por %p104, %p105
      %p108 = scmp.ne.s32.totalorder %s93, %s107
      %p109 = scmp.eq.s32.totalorder %s22, 0
      %p110 = por %p108, %p109
      %s111 = ssub.s32 %s23, %s35
      %p112 = scmp.eq.s32.totalorder %s111, 0
      %s114 = sadd.s32 %s113, 1
      %s115 = scalar_select %p112, %s113, %s114
      %p118 = pneg %p112
      %p119 = scmp.eq.s32.totalorder %s16, 3
      %p120 = por %p118, %p119
      %p121 = scmp.ne.s32.totalorder %s113, %s116
      %p122 = scmp.eq.s32.totalorder %s16, 0
      %p123 = por %p121, %p122
      %p124 = scmp.ne.s32.totalorder %s113, %s116
      %p125 = scmp.eq.s32.totalorder %s21, 3
      %p126 = por %p124, %p125
      %p127 = scmp.ne.s32.totalorder %s116, %s117
      %p128 = scmp.eq.s32.totalorder %s21, 0
      %p129 = por %p127, %p128
      %p130 = scmp.ne.s32.totalorder %s116, %s117
      %p131 = scmp.eq.s32.totalorder %s22, 3
      %p132 = por %p130, %p131
      %p134 = scmp.ne.s32.totalorder %s117, %s133
      %p135 = scmp.eq.s32.totalorder %s22, 0
      %p136 = por %p134, %p135
      %p137 = scmp.le.s32.totalorder 1, %s16
      %p138 = scmp.lt.s32.totalorder %s16, 5
      %p139 = pnand %p137, %p138
      %p140 = pneg %p139
      // Predicated region
      $region9: #{tpu_custom_call.1} parent=5 // pred_check
        _
      $region10: #{tpu_custom_call.1} parent=5 // pred_check_branch
        %142 = sbr.rel (%p139) target = $region12
      $region11: #{tpu_custom_call.1} parent=5 // pred_region
        %s143 = ssub.s32 %s16, 1
        // Predicated region
        $region13: #{tpu_custom_call.1} parent=11 // pred_check
          %p144 = pneg %p103
        $region14: #{tpu_custom_call.1} parent=11 // pred_check_branch
          %146 = sbr.rel (%p144) target = $region16
        $region15: #{tpu_custom_call.1} parent=11 // pred_region
          _
        $region16: #{tpu_custom_call.1} parent=11 // pred_fallthru
          _
      $region12: #{tpu_custom_call.1} parent=5 // pred_fallthru
        _
      %p147 = scmp.lt.s32.totalorder %s16, 4
      // Predicated region
      $region17: #{tpu_custom_call.1} parent=5 // pred_check
        %p148 = pneg %p147
      $region18: #{tpu_custom_call.1} parent=5 // pred_check_branch
        %150 = sbr.rel (%p148) target = $region20
      $region19: #{tpu_custom_call.1} parent=5 // pred_region
        // Predicated region
        $region21: #{tpu_custom_call.1} parent=19 // pred_check
          %p151 = pneg %p50
        $region22: #{tpu_custom_call.1} parent=19 // pred_check_branch
          %153 = sbr.rel (%p151) target = $region24
        $region23: #{tpu_custom_call.1} parent=19 // pred_region
          %s154 = sand.u32 %s40, 1
          %s155 = scalar_lea.sflag [#allocation4], %s154
          %s156 = sand.u32 %s40, 1
          %s157 = smul.addr %s156, 128
          %s158 = scalar_lea.vmem [#allocation3], %s157
          %s159 = smul.u32 16, %s23
          %161 = vsyncadd %s155, 0
          %s162 = smul.addr %s159, 2
          %s163 = sadd.s32 %s24, %s162
          %s164 = smul.addr %s163, 8
          %s165 = scalar_lea.hbm %s0, %s164
          %s166 = sshll.u32 %s165, 4
          %s167 = int_to_ptr.hbm [resolvable:$true] %s166
          %s168 = sshll.u32 %s158, 4
          %s169 = int_to_ptr.vmem [resolvable:$true] %s168
          %174 = dma.hbm_to_vmem [thread:$0]  %s167, 2048, %s169, %s155, 256, 128, 8
        $region24: #{tpu_custom_call.1} parent=19 // pred_fallthru
          _
        // Predicated region
        $region25: #{tpu_custom_call.1} parent=19 // pred_check
          %p175 = pneg %p76
        $region26: #{tpu_custom_call.1} parent=19 // pred_check_branch
          %177 = sbr.rel (%p175) target = $region28
        $region27: #{tpu_custom_call.1} parent=19 // pred_region
          %p178 = scmp.lt.s32.totalorder %s24, 1
          %s179 = scalar_select %p178, %s24, 1
          %s180 = scalar_lea.vmem %s1, %s179
        $region28: #{tpu_custom_call.1} parent=19 // pred_fallthru
          _
      $region20: #{tpu_custom_call.1} parent=5 // pred_fallthru
        _
      %p181 = scmp.le.s32.totalorder 1, %s16
      %p182 = scmp.lt.s32.totalorder %s16, 5
      %p183 = pnand %p181, %p182
      %p184 = pneg %p183
      // Predicated region
      $region29: #{tpu_custom_call.1} parent=5 // pred_check
        _
      $region30: #{tpu_custom_call.1} parent=5 // pred_check_branch
        %186 = sbr.rel (%p183) target = $region32
      $region31: #{tpu_custom_call.1} parent=5 // pred_region
        %s187 = ssub.s32 %s16, 1
        %s188 = sand.u32 %s43, 1
        %s189 = scalar_lea.sflag [#allocation4], %s188
        %s190 = sand.u32 %s43, 1
        %s191 = smul.addr %s190, 128
        %s192 = scalar_lea.vmem [#allocation3], %s191
        // Predicated region
        $region33: #{tpu_custom_call.1} parent=31 // pred_check
          %p193 = pneg %p56
        $region34: #{tpu_custom_call.1} parent=31 // pred_check_branch
          %195 = sbr.rel (%p193) target = $region36
        $region35: #{tpu_custom_call.1} parent=31 // pred_region
          %197 = dma.done %s189, 2048
        $region36: #{tpu_custom_call.1} parent=31 // pred_fallthru
          _
        %s198 = sand.u32 %s43, 1
        %s199 = scalar_lea.sflag [#allocation4], %s198
        %s200 = sand.u32 %s43, 1
        %s201 = smul.addr %s200, 128
        %s202 = scalar_lea.vmem [#allocation3], %s201
        %p203 = pneg %p56
        %p204 = pneg %p53
        %p205 = scmp.lt.s32.totalorder %s26, 1
        %s206 = scalar_select %p205, %s26, 1
        %s207 = scalar_lea.vmem %s1, %s206
        %p208 = pneg %p82
        %p209 = pneg %p79
        %p210 = pneg %p103
        %p211 = pneg %p100
        %p212 = pneg %p129
        %p213 = pneg %p126
        %s214 = sand.u32 %s116, 1
        %s215 = scalar_lea.sflag [#allocation5], %s214
        %s216 = sand.u32 %s116, 1
        %s217 = scalar_lea.vmem [#allocation6], %s216
        %s218 = smul.u32 16, %s25
        %p219 = scmp.lt.s32.totalorder %s26, 1
        %s220 = scalar_select %p219, %s26, 1
        %s221 = scalar_lea.vmem %s1, %s220
        %p222 = scmp.eq.s32.totalorder %s26, 0
        // Predicated region
        $region37: #{tpu_custom_call.1} parent=31 // pred_check
          %p223 = pneg %p222
        $region38: #{tpu_custom_call.1} parent=31 // pred_check_branch
          %225 = sbr.rel (%p223) target = $region40
        $region39: #{tpu_custom_call.1} parent=31 // pred_region
          %226 = vst [vmem:[%s217] sm:$0x1] 0.0
        $region40: #{tpu_custom_call.1} parent=31 // pred_fallthru
          _
        %v227 = vld [vmem:[%s217] sm:$0x1]
        %v228 = vld [vmem:[%s221] sm:$0x1]
        %v229 = vld [vmem:[%s192] sm:$0xff]
        %v230 = vld [vmem:[%s192 + $0x8] sm:$0xff]
        %v231 = vld [vmem:[%s192 + $0x10] sm:$0xff]
        %v232 = vld [vmem:[%s192 + $0x18] sm:$0xff]
        %v233 = vld [vmem:[%s192 + $0x20] sm:$0xff]
        %v234 = vld [vmem:[%s192 + $0x28] sm:$0xff]
        %v235 = vld [vmem:[%s192 + $0x30] sm:$0xff]
        %v236 = vld [vmem:[%s192 + $0x38] sm:$0xff]
        %v237 = vld [vmem:[%s192 + $0x40] sm:$0xff]
        %v238 = vld [vmem:[%s192 + $0x48] sm:$0xff]
        %v239 = vld [vmem:[%s192 + $0x50] sm:$0xff]
        %v240 = vld [vmem:[%s192 + $0x58] sm:$0xff]
        %v241 = vld [vmem:[%s192 + $0x60] sm:$0xff]
        %v242 = vld [vmem:[%s192 + $0x68] sm:$0xff]
        %v243 = vld [vmem:[%s192 + $0x70] sm:$0xff]
        %v244 = vld [vmem:[%s192 + $0x78] sm:$0xff]
        %245 = vmatpush.xpose.msra.mxu0 %v244
        %246 = vmatpush.xpose.msra.mxu0 %v243
        %247 = vmatpush.xpose.msra.mxu0 %v242
        %248 = vmatpush.xpose.msra.mxu0 %v241
        %249 = vmatpush.xpose.msra.mxu0 %v240
        %250 = vmatpush.xpose.msra.mxu0 %v239
        %251 = vmatpush.xpose.msra.mxu0 %v238
        %252 = vmatpush.xpose.msra.mxu0 %v237
        %253 = vmatpush.xpose.msra.mxu0 %v236
        %254 = vmatpush.xpose.msra.mxu0 %v235
        %255 = vmatpush.xpose.msra.mxu0 %v234
        %256 = vmatpush.xpose.msra.mxu0 %v233
        %257 = vmatpush.xpose.msra.mxu0 %v232
        %258 = vmatpush.xpose.msra.mxu0 %v231
        %259 = vmatpush.xpose.msra.mxu0 %v230
        %260 = vmatpush.xpose.msra.mxu0 %v229
        %261 = vmatmul.f32.gmra.mxu0 %v228
        %v262 = vpop.f32.mrf.mxu0
        %v263 = vadd.f32 0.0, %v262
        %264 = vdwg.mxu0
        %v265 = vadd.f32 %v227, %v263
        %266 = vst [vmem:[%s217] sm:$0x1] %v265
        %p267 = scmp.eq.s32.totalorder %s26, 1
        // Predicated region
        $region41: #{tpu_custom_call.1} parent=31 // pred_check
          %p268 = pneg %p267
        $region42: #{tpu_custom_call.1} parent=31 // pred_check_branch
          %270 = sbr.rel (%p268) target = $region44
        $region43: #{tpu_custom_call.1} parent=31 // pred_region
          %v271 = vld [vmem:[%s217] sm:$0x1]
          %s272 = sld [smem:[#allocation2]]
          %v273 = vstv %s272
          %v274 = vadd.f32 %v271, %v273
          %v275 = vmax.f32 %v274, -16.118095
          %v276 = vmin.f32 %v275, 16.118095
          %277 = vst [vmem:[%s217] sm:$0x1] %v276
        $region44: #{tpu_custom_call.1} parent=31 // pred_fallthru
          _
        %s278 = sand.u32 %s116, 1
        %s279 = scalar_lea.sflag [#allocation5], %s278
        %s280 = sand.u32 %s116, 1
        %s281 = scalar_lea.vmem [#allocation6], %s280
        // Predicated region
        $region45: #{tpu_custom_call.1} parent=31 // pred_check
          %p282 = pneg %p126
        $region46: #{tpu_custom_call.1} parent=31 // pred_check_branch
          %284 = sbr.rel (%p282) target = $region48
        $region47: #{tpu_custom_call.1} parent=31 // pred_region
          %286 = vsyncadd %s279, 0
          %s287 = scalar_lea.hbm %s3, %s25
          %s289 = sshll.u32 %s281, 4
          %s290 = int_to_ptr.vmem [resolvable:$true] %s289
          %s291 = sshll.u32 %s287, 4
          %s292 = int_to_ptr.hbm [resolvable:$true] %s291
          %294 = dma.vmem_to_hbm [thread:$0]  %s290, 16, %s292, %s279
        $region48: #{tpu_custom_call.1} parent=31 // pred_fallthru
          _
      $region32: #{tpu_custom_call.1} parent=5 // pred_fallthru
        _
      %p295 = scmp.le.s32.totalorder 2, %s16
      // Predicated region
      $region49: #{tpu_custom_call.1} parent=5 // pred_check
        %p296 = pneg %p295
      $region50: #{tpu_custom_call.1} parent=5 // pred_check_branch
        %298 = sbr.rel (%p296) target = $region52
      $region51: #{tpu_custom_call.1} parent=5 // pred_region
        %s299 = ssub.s32 %s16, 2
        // Predicated region
        $region53: #{tpu_custom_call.1} parent=51 // pred_check
          %p300 = pneg %p132
        $region54: #{tpu_custom_call.1} parent=51 // pred_check_branch
          %302 = sbr.rel (%p300) target = $region56
        $region55: #{tpu_custom_call.1} parent=51 // pred_region
          %s303 = sand.u32 %s117, 1
          %s304 = scalar_lea.sflag [#allocation5], %s303
          %s305 = sand.u32 %s117, 1
          %s306 = scalar_lea.vmem [#allocation6], %s305
          %308 = dma.done %s304, 16
        $region56: #{tpu_custom_call.1} parent=51 // pred_fallthru
          _
      $region52: #{tpu_custom_call.1} parent=5 // pred_fallthru
        _
    $region6: #{tpu_custom_call.1} parent=1 // loop_footer
      %s20 = sadd.s32 1, %s16
    $region7: #{tpu_custom_call.1} parent=1 // loop_footer_branch
      %15 = sbr.rel target = $region3
    $region8: #{tpu_custom_call.1} parent=1 // loop_exit
      _
    %309 = vsyncpa [#allocation4], 1
    %s310 = scalar_lea.sflag [#allocation4], 1
    %311 = vsyncpa %s310, 1
    %312 = vsyncpa [#allocation5], 1
    %s313 = scalar_lea.sflag [#allocation5], 1
    %314 = vsyncpa %s313, 1

</llo_original>
